<compile_context>
chip_gen: v5e
topology: v5e:2x2
jax: 0.10.0
libtpu: 0.0.40
codegen_flags: <defaults>
</compile_context>

<pallas_src>
import jax
import jax.numpy as jnp
from jax.experimental import pallas as pl
from jax.experimental.pallas import tpu as pltpu


def _focal_loss_kernel(gamma, eps, hw, tile_hw, needs_mask):
    def kernel(x_ref, t_ref, out_ref):
        j = pl.program_id(1)

        # Output block (this batch's partial sum) is resident across the whole
        # j sweep; init once per b.  Batch axis can therefore be "parallel".
        @pl.when(j == 0)
        def _():
            out_ref[...] = jnp.zeros_like(out_ref)

        x = x_ref[0].astype(jnp.float32)   # (C, TH)  classes on sublanes, HW on lanes
        t = t_ref[0].astype(jnp.int32)     # (1, TH)  target class ids

        # Numerically-stable softmax over classes (sublane axis), but only the
        # target-class probability is materialised:  p = e_t / sum_c(e_c).
        m = jnp.max(x, axis=0, keepdims=True)                      # (1, TH)
        e = jnp.exp(x - m)                                         # (C, TH)
        denom = jnp.sum(e, axis=0, keepdims=True)                  # (1, TH)
        classes = jax.lax.broadcasted_iota(jnp.int32, x.shape, 0)  # (C, TH)
        e_t = jnp.sum(jnp.where(classes == t, e, 0.0),
                      axis=0, keepdims=True)                       # (1, TH)

        # Divide on the EUP (separate VLIW slot); clip bounds the approx error.
        p = e_t * pl.reciprocal(denom, approx=True)
        p = jnp.clip(p, eps, 1.0 - eps)
        log_p = jnp.log(p)
        one_m_p = 1.0 - p
        if gamma == 2:
            focal_w = one_m_p * one_m_p          # plain VPU multiply, no pow
        else:
            focal_w = jnp.power(one_m_p, gamma)
        batch_loss = -focal_w * log_p            # (1, TH)

        if needs_mask:
            lane = jax.lax.broadcasted_iota(jnp.int32, batch_loss.shape, 1)
            valid = (j * tile_hw + lane) < hw
            batch_loss = jnp.where(valid, batch_loss, 0.0)

        # One cross-lane reduce per tile; accumulate the scalar into the
        # resident per-batch output block.
        tile_sum = jnp.sum(batch_loss, keepdims=True)       # (1, 1)
        out_ref[...] += tile_sum[None]                       # (1, 1, 1)

    return kernel


def _pick_tile_hw(hw, c, logit_itemsize, tgt_itemsize, target_bytes):
    """Largest lane-dense tile with <= target_bytes of streamed block data."""
    per_lane = c * logit_itemsize + tgt_itemsize
    cap = max(128, (target_bytes // max(1, per_lane)) // 128 * 128)
    if hw <= cap:
        return hw           # single full-extent block along HW (always legal)
    return cap              # multiple of 128; partial last block is masked


def focal_loss(logits_nchw, target_bhw, gamma=2.0, eps=1e-7, size_average=True,
               max_block_bytes=8 << 20):
    """logits_nchw: (B, C, H, W) float; target_bhw: (B, H, W) int."""
    B, C, H, W = logits_nchw.shape
    HW = H * W
    N = B * HW

    # Free reshapes only — NCHW consumed directly, no transpose, no upcast:
    # bf16 logits stream as bf16, targets stream as int8 when C fits.
    x = logits_nchw.reshape(B, C, HW)
    tgt_dtype = jnp.int8 if C <= 127 else jnp.int32
    t = target_bhw.reshape(B, 1, HW).astype(tgt_dtype)

    logit_itemsize = jnp.dtype(x.dtype).itemsize
    tgt_itemsize = jnp.dtype(t.dtype).itemsize
    tile_hw = _pick_tile_hw(HW, C, logit_itemsize, tgt_itemsize, max_block_bytes)
    grid_j = pl.cdiv(HW, tile_hw)
    needs_mask = (HW % tile_hw) != 0
    grid = (B, grid_j)

    # Explicit scoped-VMEM budget: 2x double-buffered blocks + headroom,
    # floored at 32 MiB (raises v5e's 16 MiB default) and capped at 48 MiB
    # (headroom under v7x's 64 MiB physical VMEM).
    logits_blk = C * tile_hw * logit_itemsize
    tgt_blk = tile_hw * tgt_itemsize
    vmem_bytes = 2 * (logits_blk + tgt_blk) + (1 << 20)
    vmem_bytes = int(min(max(vmem_bytes, 32 << 20), 48 << 20))

    partials = pl.pallas_call(
        _focal_loss_kernel(gamma, eps, HW, tile_hw, needs_mask),
        out_shape=jax.ShapeDtypeStruct((B, 1, 1), jnp.float32),
        grid_spec=pltpu.PrefetchScalarGridSpec(
            num_scalar_prefetch=0,
            grid=grid,
            in_specs=[
                pl.BlockSpec((1, C, tile_hw), lambda b, j: (b, 0, j)),
                pl.BlockSpec((1, 1, tile_hw), lambda b, j: (b, 0, j)),
            ],
            out_specs=pl.BlockSpec((1, 1, 1), lambda b, j: (b, 0, 0)),
        ),
        compiler_params=pltpu.CompilerParams(
            dimension_semantics=("parallel", "arbitrary"),
            vmem_limit_bytes=vmem_bytes,
        ),
    )(x, t)

    total = jnp.sum(partials)
    if size_average:
        return total / jnp.float32(N)
    return total


def _reference(logits_nchw, target_bhw, gamma=2.0, eps=1e-7):
    B, C, H, W = logits_nchw.shape
    x = jnp.transpose(logits_nchw, (0, 2, 3, 1)).reshape(-1, C)
    t = target_bhw.reshape(-1)
    probs = jax.nn.softmax(x, axis=1)
    p = jnp.take_along_axis(probs, t[:, None], axis=1)[:, 0]
    p = jnp.clip(p, eps, 1.0 - eps)
    return jnp.mean(-((1.0 - p) ** gamma) * jnp.log(p))


if __name__ == "__main__":
    key = jax.random.PRNGKey(0)
    k1, k2, k3, k4 = jax.random.split(key, 4)

    # Test 1: small canonical shape (single block per batch).
    B, C, H, W = 2, 4, 16, 16
    logits = jax.random.normal(k1, (B, C, H, W), dtype=jnp.float32)
    target = jax.random.randint(k2, (B, H, W), 0, C, dtype=jnp.int32)
    loss = jax.block_until_ready(focal_loss(logits, target))
    ref = _reference(logits, target)
    # approx reciprocal (EUP) introduces ~2^-12 relative error per pixel.
    assert jnp.allclose(loss, ref, rtol=2e-3, atol=2e-3), (loss, ref)

    # Test 2: HW not a multiple of the tile — exercises cdiv grid + lane mask
    # (block budget forced tiny so tile_hw=128 and the last block is partial).
    B2, C2, H2, W2 = 2, 4, 16, 20
    logits2 = jax.random.normal(k3, (B2, C2, H2, W2), dtype=jnp.float32)
    target2 = jax.random.randint(k4, (B2, H2, W2), 0, C2, dtype=jnp.int32)
    loss2 = jax.block_until_ready(focal_loss(logits2, target2,
                                             max_block_bytes=4096))
    ref2 = _reference(logits2, target2)
    assert jnp.allclose(loss2, ref2, rtol=2e-3, atol=2e-3), (loss2, ref2)

    print("KERNEL_OK")
</pallas_src>

<mosaic_0001>
module attributes {stable_mosaic.version = 11 : i64} {
  func.func @kernel(%arg0: i32, %arg1: i32, %arg2: memref<1x4x256xf32, #tpu.memory_space<vmem>>, %arg3: memref<1x1x256xi8, #tpu.memory_space<vmem>>, %arg4: memref<1x1x1xf32, #tpu.memory_space<vmem>>) attributes {dimension_semantics = [#tpu.dimension_semantics<parallel>, #tpu.dimension_semantics<arbitrary>], iteration_bounds = array<i64: 2, 1>, scalar_prefetch = 0 : i64, scratch_operands = 0 : i64, tpu.core_type = #tpu.core_type<tc>, window_params = [{transform_indices = @transform_0, window_bounds = array<i64: 1, 4, 256>}, {transform_indices = @transform_1, window_bounds = array<i64: 1, 1, 256>}, {transform_indices = @transform_2, window_bounds = array<i64: 1, 1, 1>}]} {
    %c0_i32 = arith.constant 0 : i32
    %0 = arith.cmpi eq, %arg1, %c0_i32 : i32
    %1 = arith.extui %0 : i1 to i32
    %c0_i32_0 = arith.constant 0 : i32
    %2 = arith.cmpi ne, %1, %c0_i32_0 : i32
    scf.if %2 {
      %cst_20 = arith.constant 0.000000e+00 : f32
      %44 = vector.broadcast %cst_20 : f32 to vector<1x1x1xf32>
      %c0_21 = arith.constant 0 : index
      %c0_22 = arith.constant 0 : index
      %c0_23 = arith.constant 0 : index
      %45 = vector.load %arg4[%c0_21, %c0_22, %c0_23] : memref<1x1x1xf32, #tpu.memory_space<vmem>>, vector<1x1x1xf32>
      tpu.vector_store %arg4[%c0_21, %c0_22, %c0_23], %44 {strides = array<i32>} : memref<1x1x1xf32, #tpu.memory_space<vmem>>, vector<1x1x1xf32>,
    } else {
    }
    %c0 = arith.constant 0 : index
    %c0_1 = arith.constant 0 : index
    %c0_2 = arith.constant 0 : index
    %3 = vector.load %arg2[%c0, %c0_1, %c0_2] : memref<1x4x256xf32, #tpu.memory_space<vmem>>, vector<1x4x256xf32>
    %4 = vector.shape_cast %3 : vector<1x4x256xf32> to vector<4x256xf32>
    %c0_3 = arith.constant 0 : index
    %c0_4 = arith.constant 0 : index
    %c0_5 = arith.constant 0 : index
    %5 = vector.load %arg3[%c0_3, %c0_4, %c0_5] : memref<1x1x256xi8, #tpu.memory_space<vmem>>, vector<1x1x256xi8>
    %6 = vector.shape_cast %5 : vector<1x1x256xi8> to vector<1x256xi8>
    %7 = arith.extsi %6 : vector<1x256xi8> to vector<1x256xi32>
    %cst = arith.constant dense<0xFF800000> : vector<256xf32>
    %8 = vector.multi_reduction <maximumf>, %4, %cst [0] : vector<4x256xf32> to vector<256xf32>
    %9 = vector.shape_cast %8 : vector<256xf32> to vector<1x256xf32>
    %10 = vector.broadcast %9 : vector<1x256xf32> to vector<4x256xf32>
    %11 = arith.subf %4, %10 : vector<4x256xf32>
    %12 = math.exp %11 : vector<4x256xf32>
    %cst_6 = arith.constant dense<0.000000e+00> : vector<256xf32>
    %13 = vector.multi_reduction <add>, %12, %cst_6 [0] : vector<4x256xf32> to vector<256xf32>
    %14 = vector.shape_cast %13 : vector<256xf32> to vector<1x256xf32>
    %15 = tpu.iota {dimensions = array<i32: 0>} : vector<4x256xi32>
    %16 = vector.broadcast %7 : vector<1x256xi32> to vector<4x256xi32>
    %17 = arith.cmpi eq, %15, %16 : vector<4x256xi32>
    %cst_7 = arith.constant 0.000000e+00 : f32
    %18 = vector.broadcast %cst_7 : f32 to vector<4x256xf32>
    %19 = arith.select %17, %12, %18 : vector<4x256xi1>, vector<4x256xf32>
    %cst_8 = arith.constant dense<0.000000e+00> : vector<256xf32>
    %20 = vector.multi_reduction <add>, %19, %cst_8 [0] : vector<4x256xf32> to vector<256xf32>
    %21 = vector.shape_cast %20 : vector<256xf32> to vector<1x256xf32>
    %22 = tpu.reciprocal %14 {approx = true} : vector<1x256xf32> -> vector<1x256xf32>
    %23 = arith.mulf %21, %22 : vector<1x256xf32>
    %cst_9 = arith.constant 1.000000e-07 : f32
    %cst_10 = arith.constant 0.99999988 : f32
    %24 = vector.broadcast %cst_9 : f32 to vector<1x256xf32>
    %25 = arith.maximumf %24, %23 : vector<1x256xf32>
    %26 = vector.broadcast %cst_10 : f32 to vector<1x256xf32>
    %27 = arith.minimumf %26, %25 : vector<1x256xf32>
    %28 = math.log %27 : vector<1x256xf32>
    %cst_11 = arith.constant 1.000000e+00 : f32
    %29 = vector.broadcast %cst_11 : f32 to vector<1x256xf32>
    %30 = arith.subf %29, %27 : vector<1x256xf32>
    %31 = arith.mulf %30, %30 : vector<1x256xf32>
    %cst_12 = arith.constant 0.000000e+00 : f32
    %32 = vector.broadcast %cst_12 : f32 to vector<1x256xf32>
    %33 = arith.subf %32, %31 : vector<1x256xf32>
    %34 = arith.mulf %33, %28 : vector<1x256xf32>
    %35 = vector.shape_cast %34 : vector<1x256xf32> to vector<1x1x256xf32>
    %cst_13 = arith.constant dense<0.000000e+00> : vector<1xf32>
    %36 = vector.multi_reduction <add>, %35, %cst_13 [1, 2] : vector<1x1x256xf32> to vector<1xf32>
    %37 = vector.shape_cast %36 : vector<1xf32> to vector<1x1x1xf32>
    %38 = vector.extract %37[0, 0, 0] : f32 from vector<1x1x1xf32>
    %39 = vector.broadcast %38 : f32 to vector<1x1xf32>
    %c0_14 = arith.constant 0 : index
    %c0_15 = arith.constant 0 : index
    %c0_16 = arith.constant 0 : index
    %40 = vector.load %arg4[%c0_14, %c0_15, %c0_16] : memref<1x1x1xf32, #tpu.memory_space<vmem>>, vector<1x1x1xf32>
    %41 = vector.shape_cast %39 : vector<1x1xf32> to vector<1x1x1xf32>
    %42 = arith.addf %40, %41 : vector<1x1x1xf32>
    %c0_17 = arith.constant 0 : index
    %c0_18 = arith.constant 0 : index
    %c0_19 = arith.constant 0 : index
    %43 = vector.load %arg4[%c0_17, %c0_18, %c0_19] : memref<1x1x1xf32, #tpu.memory_space<vmem>>, vector<1x1x1xf32>
    tpu.vector_store %arg4[%c0_17, %c0_18, %c0_19], %42 {strides = array<i32>} : memref<1x1x1xf32, #tpu.memory_space<vmem>>, vector<1x1x1xf32>,
    return
  }
  func.func @transform_0(%arg0: i32, %arg1: i32) -> (i32, i32, i32) {
    %c0_i32 = arith.constant 0 : i32
    %c0_i32_0 = arith.constant 0 : i32
    return %arg0, %c0_i32, %arg1 : i32, i32, i32
  }
  func.func @transform_1(%arg0: i32, %arg1: i32) -> (i32, i32, i32) {
    %c0_i32 = arith.constant 0 : i32
    %c0_i32_0 = arith.constant 0 : i32
    return %arg0, %c0_i32, %arg1 : i32, i32, i32
  }
  func.func @transform_2(%arg0: i32, %arg1: i32) -> (i32, i32, i32) {
    %c0_i32 = arith.constant 0 : i32
    %c0_i32_0 = arith.constant 0 : i32
    %c0_i32_1 = arith.constant 0 : i32
    return %arg0, %c0_i32, %c0_i32_0 : i32, i32, i32
  }
}

</mosaic_0001>

<llo_original>
// kernel: tpu_custom_call.1
$region0: #{tpu_custom_call.1}
  #allocation0 [shape = 'u32[]', space=smem, size = 0x4, offset = 0x4, fixed_abs, tag = 'smem constant byte address 0x4 - core index']
  #allocation1 [shape = 'u32[72,128]{1,0:T(1,128)}', space=vmem, size = 0x9000, scoped, tag = 'internal scratch']
  %s0 = inlined_call_operand.hbm [shape: f32[2,4,256], index: 0, kind: input, shape index: {}]
  %s1 = inlined_call_operand.vmem [shape: s8[2,1,256], index: 1, kind: input, shape index: {}]
  %s2 = inlined_call_operand.vmem [shape: f32[2,1,1], index: 2, kind: output, shape index: {}]
  %s3 = sld [smem:[#allocation0]]
  $region49: #{tpu_custom_call.1} parent=0
    _
  %s5 = ssub.s32 1, %s3
  %s6 = scalar_select 0, %s5, %s3
  $region1: #{tpu_custom_call.1} parent=0
    #allocation2 [shape = 'u8[8192]{0}', space=vmem, size = 0x2000, scoped, tag = 'input window, operand 0']
    #allocation3 [shape = 's32[2]{0}', space=sflag, size = 0x8, scoped, tag = 'scoped memory for tpu_custom_call.1']
    %7 = vsyncpa [#allocation3], 0
    %s8 = scalar_lea.sflag [#allocation3], 1
    %9 = vsyncpa %s8, 0
    loop: start=0, step=1, limit=4
    $region2: #{tpu_custom_call.1} parent=1 // loop_pre_header
      _
    $region3: #{tpu_custom_call.1} parent=1 // loop_header
      %s11 = sphi 0, %s15
      %p12 = scmp.ge.s32.totalorder %s11, 4
      %s18 = sphi 0, %s30
      %s19 = sphi 0, %s26
      %s20 = sphi 0, %s18
      %s21 = sphi 0, %s19
      %s22 = sphi 0, %s20
      %s23 = sphi 0, %s21
      %s35 = sphi 0, %s37
      %s38 = sphi 0, %s35
      %s39 = sphi 0, %s38
      %s55 = sphi 0, %s39
      %s63 = sphi 0, %s65
      %s66 = sphi 0, %s63
      %s67 = sphi 0, %s66
      %s83 = sphi 0, %s67
      %s89 = sphi 0, %s91
      %s92 = sphi 0, %s89
      %s93 = sphi 0, %s92
      %s109 = sphi 0, %s93
    $region4: #{tpu_custom_call.1} parent=1 // loop_header_branch
      %14 = sbr.rel (%p12) target = $region8
    $region5: #{tpu_custom_call.1} parent=1 // loop_body
      %s16 = ssub.s32 %s11, 1
      %s17 = ssub.s32 %s11, 2
      %s24 = sadd.s32 1, %s19
      %p25 = scmp.ge.s32.totalorder %s24, 1
      %s26 = scalar_select %p25, 0, %s24
      %s27 = sadd.s32 1, %s18
      %s28 = scalar_select %p25, %s27, %s18
      %p29 = scmp.ge.s32.totalorder %s28, 2
      %s30 = scalar_select %p29, 0, %s28
      %s31 = ssub.s32 %s18, %s30
      %s32 = ssub.s32 %s19, %s26
      %s33 = sor.u32 %s31, %s32
      %p34 = scmp.eq.s32.totalorder %s33, 0
      %s36 = sadd.s32 %s35, 1
      %s37 = scalar_select %p34, %s35, %s36
      %p40 = pneg %p34
      %p41 = scmp.eq.s32.totalorder %s11, 1
      %p42 = por %p40, %p41
      %p43 = scmp.ne.s32.totalorder %s35, %s38
      %p44 = scmp.eq.s32.totalorder %s11, 0
      %p45 = por %p43, %p44
      %p46 = scmp.ne.s32.totalorder %s35, %s38
      %p47 = scmp.eq.s32.totalorder %s16, 1
      %p48 = por %p46, %p47
      %p49 = scmp.ne.s32.totalorder %s38, %s39
      %p50 = scmp.eq.s32.totalorder %s16, 0
      %p51 = por %p49, %p50
      %p52 = scmp.ne.s32.totalorder %s38, %s39
      %p53 = scmp.eq.s32.totalorder %s17, 1
      %p54 = por %p52, %p53
      %p56 = scmp.ne.s32.totalorder %s39, %s55
      %p57 = scmp.eq.s32.totalorder %s17, 0
      %p58 = por %p56, %p57
      %s59 = ssub.s32 %s18, %s30
      %s60 = ssub.s32 %s19, %s26
      %s61 = sor.u32 %s59, %s60
      %p62 = scmp.eq.s32.totalorder %s61, 0
      %s64 = sadd.s32 %s63, 1
      %s65 = scalar_select %p62, %s63, %s64
      %p68 = pneg %p62
      %p69 = scmp.eq.s32.totalorder %s11, 1
      %p70 = por %p68, %p69
      %p71 = scmp.ne.s32.totalorder %s63, %s66
      %p72 = scmp.eq.s32.totalorder %s11, 0
      %p73 = por %p71, %p72
      %p74 = scmp.ne.s32.totalorder %s63, %s66
      %p75 = scmp.eq.s32.totalorder %s16, 1
      %p76 = por %p74, %p75
      %p77 = scmp.ne.s32.totalorder %s66, %s67
      %p78 = scmp.eq.s32.totalorder %s16, 0
      %p79 = por %p77, %p78
      %p80 = scmp.ne.s32.totalorder %s66, %s67
      %p81 = scmp.eq.s32.totalorder %s17, 1
      %p82 = por %p80, %p81
      %p84 = scmp.ne.s32.totalorder %s67, %s83
      %p85 = scmp.eq.s32.totalorder %s17, 0
      %p86 = por %p84, %p85
      %s87 = ssub.s32 %s18, %s30
      %p88 = scmp.eq.s32.totalorder %s87, 0
      %s90 = sadd.s32 %s89, 1
      %s91 = scalar_select %p88, %s89, %s90
      %p94 = pneg %p88
      %p95 = scmp.eq.s32.totalorder %s11, 1
      %p96 = por %p94, %p95
      %p97 = scmp.ne.s32.totalorder %s89, %s92
      %p98 = scmp.eq.s32.totalorder %s11, 0
      %p99 = por %p97, %p98
      %p100 = scmp.ne.s32.totalorder %s89, %s92
      %p101 = scmp.eq.s32.totalorder %s16, 1
      %p102 = por %p100, %p101
      %p103 = scmp.ne.s32.totalorder %s92, %s93
      %p104 = scmp.eq.s32.totalorder %s16, 0
      %p105 = por %p103, %p104
      %p106 = scmp.ne.s32.totalorder %s92, %s93
      %p107 = scmp.eq.s32.totalorder %s17, 1
      %p108 = por %p106, %p107
      %p110 = scmp.ne.s32.totalorder %s93, %s109
      %p111 = scmp.eq.s32.totalorder %s17, 0
      %p112 = por %p110, %p111
      %p113 = scmp.le.s32.totalorder 1, %s11
      %p114 = scmp.lt.s32.totalorder %s11, 3
      %p115 = pnand %p113, %p114
      %p116 = pneg %p115
      // Predicated region
      $region9: #{tpu_custom_call.1} parent=5 // pred_check
        _
      $region10: #{tpu_custom_call.1} parent=5 // pred_check_branch
        %118 = sbr.rel (%p115) target = $region12
      $region11: #{tpu_custom_call.1} parent=5 // pred_region
        %s119 = ssub.s32 %s11, 1
      $region12: #{tpu_custom_call.1} parent=5 // pred_fallthru
        _
      %p120 = scmp.lt.s32.totalorder %s11, 2
      // Predicated region
      $region13: #{tpu_custom_call.1} parent=5 // pred_check
        %p121 = pneg %p120
      $region14: #{tpu_custom_call.1} parent=5 // pred_check_branch
        %123 = sbr.rel (%p121) target = $region16
      $region15: #{tpu_custom_call.1} parent=5 // pred_region
        // Predicated region
        $region17: #{tpu_custom_call.1} parent=15 // pred_check
          %p124 = pneg %p45
        $region18: #{tpu_custom_call.1} parent=15 // pred_check_branch
          %126 = sbr.rel (%p124) target = $region20
        $region19: #{tpu_custom_call.1} parent=15 // pred_region
          %s127 = sand.u32 %s35, 1
          %s128 = scalar_lea.sflag [#allocation3], %s127
          %s129 = sand.u32 %s35, 1
          %s130 = smul.addr %s129, 8
          %s131 = scalar_lea.vmem [#allocation2], %s130
          %s132 = smul.u32 2, %s19
          %134 = vsyncadd %s128, 0
          %s135 = smul.addr %s18, 2
          %s136 = sadd.s32 %s132, %s135
          %s137 = smul.addr %s136, 4
          %s138 = scalar_lea.hbm %s0, %s137
          %s140 = sshll.u32 %s138, 4
          %s141 = int_to_ptr.hbm [resolvable:$true] %s140
          %s142 = sshll.u32 %s131, 4
          %s143 = int_to_ptr.vmem [resolvable:$true] %s142
          %145 = dma.hbm_to_vmem [thread:$0]  %s141, 128, %s143, %s128
        $region20: #{tpu_custom_call.1} parent=15 // pred_fallthru
          _
        // Predicated region
        $region21: #{tpu_custom_call.1} parent=15 // pred_check
          %p146 = pneg %p73
        $region22: #{tpu_custom_call.1} parent=15 // pred_check_branch
          %148 = sbr.rel (%p146) target = $region24
        $region23: #{tpu_custom_call.1} parent=15 // pred_region
          %s149 = smul.u32 2, %s19
          %p150 = scmp.lt.s32.totalorder %s18, 1
          %s151 = scalar_select %p150, %s18, 1
          %p152 = scmp.lt.s32.totalorder %s149, 1
          %s153 = scalar_select %p152, %s149, 1
          %s154 = smul.addr %s151, 2
          %s155 = sadd.s32 %s153, %s154
          %s156 = scalar_lea.vmem %s1, %s155
          %s157 = smul.u32 2, %s19
        $region24: #{tpu_custom_call.1} parent=15 // pred_fallthru
          _
      $region16: #{tpu_custom_call.1} parent=5 // pred_fallthru
        _
      %p158 = scmp.le.s32.totalorder 1, %s11
      %p159 = scmp.lt.s32.totalorder %s11, 3
      %p160 = pnand %p158, %p159
      %p161 = pneg %p160
      // Predicated region
      $region25: #{tpu_custom_call.1} parent=5 // pred_check
        _
      $region26: #{tpu_custom_call.1} parent=5 // pred_check_branch
        %163 = sbr.rel (%p160) target = $region28
      $region27: #{tpu_custom_call.1} parent=5 // pred_region
        %s164 = ssub.s32 %s11, 1
        %s165 = sand.u32 %s38, 1
        %s166 = scalar_lea.sflag [#allocation3], %s165
        %s167 = sand.u32 %s38, 1
        %s168 = smul.addr %s167, 8
        %s169 = scalar_lea.vmem [#allocation2], %s168
        // Predicated region
        $region29: #{tpu_custom_call.1} parent=27 // pred_check
          %p170 = pneg %p51
        $region30: #{tpu_custom_call.1} parent=27 // pred_check_branch
          %172 = sbr.rel (%p170) target = $region32
        $region31: #{tpu_custom_call.1} parent=27 // pred_region
          %174 = dma.done %s166, 128
        $region32: #{tpu_custom_call.1} parent=27 // pred_fallthru
          _
        %s175 = sand.u32 %s38, 1
        %s176 = scalar_lea.sflag [#allocation3], %s175
        %s177 = sand.u32 %s38, 1
        %s178 = smul.addr %s177, 8
        %s179 = scalar_lea.vmem [#allocation2], %s178
        %p180 = pneg %p51
        %p181 = pneg %p48
        %s182 = smul.u32 2, %s21
        %p183 = scmp.lt.s32.totalorder %s20, 1
        %s184 = scalar_select %p183, %s20, 1
        %p185 = scmp.lt.s32.totalorder %s182, 1
        %s186 = scalar_select %p185, %s182, 1
        %s187 = smul.addr %s184, 2
        %s188 = sadd.s32 %s186, %s187
        %s189 = scalar_lea.vmem %s1, %s188
        %p190 = pneg %p79
        %p191 = pneg %p76
        %p192 = pneg %p105
        %p193 = pneg %p102
        %p194 = scmp.lt.s32.totalorder %s20, 1
        %s195 = scalar_select %p194, %s20, 1
        %s196 = scalar_lea.vmem %s2, %s195
        %s197 = smul.u32 2, %s21
        %s198 = smul.u32 2, %s21
        %p199 = scmp.lt.s32.totalorder %s20, 1
        %s200 = scalar_select %p199, %s20, 1
        %p201 = scmp.lt.s32.totalorder %s198, 1
        %s202 = scalar_select %p201, %s198, 1
        %s203 = smul.addr %s200, 2
        %s204 = sadd.s32 %s202, %s203
        %s205 = scalar_lea.vmem %s1, %s204
        %s206 = smul.u32 2, %s21
        %p207 = scmp.lt.s32.totalorder %s20, 1
        %s208 = scalar_select %p207, %s20, 1
        %s209 = scalar_lea.vmem %s2, %s208
        %p210 = scmp.eq.s32.totalorder %s21, 0
        // Predicated region
        $region33: #{tpu_custom_call.1} parent=27 // pred_check
          %p211 = pneg %p210
        $region34: #{tpu_custom_call.1} parent=27 // pred_check_branch
          %213 = sbr.rel (%p211) target = $region36
        $region35: #{tpu_custom_call.1} parent=27 // pred_region
          %vm214 = vcmask 0
          %215 = vst.msk [vmem:[%s209] sm:$0x1] %vm214, 0.0
        $region36: #{tpu_custom_call.1} parent=27 // pred_fallthru
          _
        %v216 = vld [vmem:[%s169] sm:$0xff]
        %v217 = vld [vmem:[%s205] sm:$0x3]
        %v218 = vunpack.c.0.s8 %v217
        %220 = vst [vmem:[#allocation1] ss:$2 sm:$0xff] %v216
        %v221 = vld.sshfl [vmem:[#allocation1] sm:$0xff pattern:$0x75316420]
        %v222 = vld.sshfl [vmem:[#allocation1 + $0x8] sm:$0xff pattern:$0x75316420]
        %vm225 = vcmask 1043456
        %v226 = vsel %vm225, %v221, -inf
        %v227 = vrot.slane %v226, 4
        %v228 = vmax.f32 %v226, %v227
        %v229 = vrot.slane %v228, 2
        %v230 = vmax.f32 %v228, %v229
        %v231 = vrot.slane %v230, 1
        %v232 = vmax.f32 %v230, %v231
        %v233 = vsel %vm225, %v222, -inf
        %v234 = vrot.slane %v233, 4
        %v235 = vmax.f32 %v233, %v234
        %v236 = vrot.slane %v235, 2
        %v237 = vmax.f32 %v235, %v236
        %v238 = vrot.slane %v237, 1
        %v239 = vmax.f32 %v237, %v238
        %v242 = vrot.slane %v239, 4
        %v243 = vsel %vm225, %v232, %v242
        %v245 = vsub.f32 %v216, %v243
        %v246 = vmul.f32 %v245, 1.442695
        %v247 = vpow.pop %v246
        %249 = vst [vmem:[#allocation1] ss:$2 sm:$0xff] %v247
        %v250 = vld.sshfl [vmem:[#allocation1] sm:$0xff pattern:$0x75316420]
        %v251 = vld.sshfl [vmem:[#allocation1 + $0x8] sm:$0xff pattern:$0x75316420]
        %v254 = vsel %vm225, %v250, 0.0
        %v255 = vrot.slane %v254, 4
        %v256 = vadd.f32 %v254, %v255
        %v257 = vrot.slane %v256, 2
        %v258 = vadd.f32 %v256, %v257
        %v259 = vrot.slane %v258, 1
        %v260 = vadd.f32 %v258, %v259
        %v261 = vsel %vm225, %v251, 0.0
        %v262 = vrot.slane %v261, 4
        %v263 = vadd.f32 %v261, %v262
        %v264 = vrot.slane %v263, 2
        %v265 = vadd.f32 %v263, %v264
        %v266 = vrot.slane %v265, 1
        %v267 = vadd.f32 %v265, %v266
        %v268 = vlaneseq
        %v269 = vshrl.u32 %v268, 7
        %v270 = vperm.slane %v218, 0
        %v271 = vperm.slane %v218, 4
        %v272 = vperm.slane %v270, 0
        %v273 = vperm.slane %v271, 0
        %vm274 = vcmp.eq.s32.totalorder %v269, %v272
        %vm275 = vcmp.eq.s32.totalorder %v269, %v273
        %276 = vst [vmem:[#allocation1] ss:$2 sm:$0xff] %v247
        %v277 = vld.sshfl [vmem:[#allocation1] sm:$0xff pattern:$0x75316420]
        %v278 = vld.sshfl [vmem:[#allocation1 + $0x8] sm:$0xff pattern:$0x75316420]
        %v281 = vsel %vm274, %v277, 0.0
        %v282 = vsel %vm275, %v278, 0.0
        %v283 = vsel %vm225, %v281, 0.0
        %v284 = vrot.slane %v283, 4
        %v285 = vadd.f32 %v283, %v284
        %v286 = vrot.slane %v285, 2
        %v287 = vadd.f32 %v285, %v286
        %v288 = vrot.slane %v287, 1
        %v289 = vadd.f32 %v287, %v288
        %v290 = vsel %vm225, %v282, 0.0
        %v291 = vrot.slane %v290, 4
        %v292 = vadd.f32 %v290, %v291
        %v293 = vrot.slane %v292, 2
        %v294 = vadd.f32 %v292, %v293
        %v295 = vrot.slane %v294, 1
        %v296 = vadd.f32 %v294, %v295
        %v297 = vrcp.pop %v260
        %v298 = vrcp.pop %v267
        %v299 = vmul.f32 %v289, %v297
        %v300 = vmul.f32 %v296, %v298
        %v301 = vmax.f32 %v299, 1e-07
        %v302 = vmax.f32 %v300, 1e-07
        %v303 = vmin.f32 %v301, 0.9999999
        %v304 = vmin.f32 %v302, 0.9999999
        %v305 = vlog2.pop %v303
        %v306 = vmul.f32 %v305, 0.6931472
        %v307 = vlog2.pop %v304
        %v308 = vmul.f32 %v307, 0.6931472
        %v309 = vsub.f32 1.0, %v303
        %v310 = vsub.f32 1.0, %v304
        %v311 = vmul.f32 %v309, %v309
        %v312 = vmul.f32 %v310, %v310
        %v313 = vsub.f32 0.0, %v311
        %v314 = vsub.f32 0.0, %v312
        %v315 = vmul.f32 %v313, %v306
        %v316 = vmul.f32 %v314, %v308
        %vm317 = vcmask 1040384
        %v318 = vsel %vm317, %v315, 0.0
        %v319 = vsel %vm317, %v316, 0.0
        %v320 = vadd.f32 %v318, %v319
        %321 = vadd.xlane.f32.xlu0 %v320
        %v322 = vpop.xlane.xlu0 %321
        %v323 = vrot.slane %v322, 4
        %v324 = vadd.f32 %v322, %v323
        %v325 = vrot.slane %v324, 2
        %v326 = vadd.f32 %v324, %v325
        %v327 = vrot.slane %v326, 1
        %v328 = vadd.f32 %v326, %v327
        %s329 = vtos %v328
        %v330 = vld [vmem:[%s209] sm:$0x1]
        %v331 = vstv %s329
        %v332 = vadd.f32 %v330, %v331
        %vm333 = vcmask 0
        %334 = vst.msk [vmem:[%s209] sm:$0x1] %vm333, %v332
        %p335 = scmp.lt.s32.totalorder %s20, 1
        %s336 = scalar_select %p335, %s20, 1
        %s337 = scalar_lea.vmem %s2, %s336
        // Predicated region
        $region37: #{tpu_custom_call.1} parent=27 // pred_check
          %p338 = pneg %p102
        $region38: #{tpu_custom_call.1} parent=27 // pred_check_branch
          %340 = sbr.rel (%p338) target = $region40
        $region39: #{tpu_custom_call.1} parent=27 // pred_region
          _
        $region40: #{tpu_custom_call.1} parent=27 // pred_fallthru
          _
      $region28: #{tpu_custom_call.1} parent=5 // pred_fallthru
        _
      %p341 = scmp.le.s32.totalorder 2, %s11
      // Predicated region
      $region41: #{tpu_custom_call.1} parent=5 // pred_check
        %p342 = pneg %p341
      $region42: #{tpu_custom_call.1} parent=5 // pred_check_branch
        %344 = sbr.rel (%p342) target = $region44
      $region43: #{tpu_custom_call.1} parent=5 // pred_region
        %s345 = ssub.s32 %s11, 2
        // Predicated region
        $region45: #{tpu_custom_call.1} parent=43 // pred_check
          %p346 = pneg %p108
        $region46: #{tpu_custom_call.1} parent=43 // pred_check_branch
          %348 = sbr.rel (%p346) target = $region48
        $region47: #{tpu_custom_call.1} parent=43 // pred_region
          %p349 = scmp.lt.s32.totalorder %s22, 1
          %s350 = scalar_select %p349, %s22, 1
          %s351 = scalar_lea.vmem %s2, %s350
        $region48: #{tpu_custom_call.1} parent=43 // pred_fallthru
          _
      $region44: #{tpu_custom_call.1} parent=5 // pred_fallthru
        _
    $region6: #{tpu_custom_call.1} parent=1 // loop_footer
      %s15 = sadd.s32 1, %s11
    $region7: #{tpu_custom_call.1} parent=1 // loop_footer_branch
      %10 = sbr.rel target = $region3
    $region8: #{tpu_custom_call.1} parent=1 // loop_exit
      _
    %352 = vsyncpa [#allocation3], 1
    %s353 = scalar_lea.sflag [#allocation3], 1
    %354 = vsyncpa %s353, 1

</llo_original>
